<compile_context>
chip_gen: v6e
topology: v6e:2x2x1
jax: 0.10.0
libtpu: 0.0.40
codegen_flags: <defaults>
</compile_context>

<pallas_src>
import functools

import jax
import jax.numpy as jnp
import numpy as np
from jax.experimental import pallas as pl
from jax.experimental.pallas import tpu as pltpu


def _round_up(v, m):
    return ((v + m - 1) // m) * m


def _vmem_capacity_bytes():
    """Physical per-core VMEM (128 MiB on v5e/v6e, 64 MiB on v7x)."""
    try:
        cap = int(getattr(pltpu.get_tpu_info(), "vmem_capacity_bytes", 0))
        if cap > 0:
            return cap
    except Exception:
        pass
    return 64 * 1024 * 1024  # conservative default (v7x-sized)


# ---------------------------------------------------------------------------
# Fused fast path: whole x resident in VMEM, one kernel, one HBM read of x.
# ---------------------------------------------------------------------------
def _fused_kernel(x_ref, w_ref, b_ref, att_ref, out_ref, *, mm_bf16):
    M, N, _ = x_ref.shape
    w = w_ref[...]
    if mm_bf16:
        w = w.astype(jnp.bfloat16)
    bias = b_ref[...].astype(jnp.float32)      # (1, H)
    att = att_ref[...].astype(jnp.float32)     # (1, H)
    inv_n = 1.0 / N

    # Per-view score: att . mean_n tanh(x_m @ W + b)   -> (1, 1) each.
    scores = []
    for m in range(M):
        lhs = x_ref[m]
        if mm_bf16:
            lhs = lhs.astype(jnp.bfloat16)
        h = jnp.tanh(jnp.dot(lhs, w, preferred_element_type=jnp.float32)
                     + bias)                                       # (N, H) f32
        sp = jnp.sum(h, axis=0, keepdims=True) * inv_n             # (1, H)
        scores.append(jnp.sum(sp * att, axis=-1, keepdims=True))   # (1, 1)

    # Softmax over the M scalar scores (max-subtracted, EUP reciprocal).
    mx = scores[0]
    for m in range(1, M):
        mx = jnp.maximum(mx, scores[m])
    exps = [jnp.exp(s - mx) for s in scores]
    denom = exps[0]
    for m in range(1, M):
        denom = denom + exps[m]
    r = pl.reciprocal(denom, approx=True)
    r = r * (2.0 - denom * r)           # one Newton step -> ~f32 accuracy

    # z = sum_m beta_m * x_m  (f32 accumulation, no bulk f32 copy of x).
    acc = x_ref[0].astype(jnp.float32) * (exps[0] * r)
    for m in range(1, M):
        acc = acc + x_ref[m].astype(jnp.float32) * (exps[m] * r)
    out_ref[...] = acc.astype(out_ref.dtype)


# ---------------------------------------------------------------------------
# Tiled Pass A: per-tile partial row sums of tanh(x @ W + b)  (parallel grid).
# ---------------------------------------------------------------------------
def _partial_rowsum_kernel(x_ref, w_ref, b_ref, out_ref, *, n_rows, mm_bf16):
    i = pl.program_id(0)
    M, nt, H = x_ref.shape

    x2 = x_ref[...].reshape(M * nt, H)           # nt % 8 == 0 -> aligned merge
    w = w_ref[...]
    if mm_bf16:
        x2 = x2.astype(jnp.bfloat16)
        w = w.astype(jnp.bfloat16)
    h = jnp.tanh(jnp.dot(x2, w, preferred_element_type=jnp.float32)
                 + b_ref[...].astype(jnp.float32))
    h = h.reshape(M, nt, H)

    rem = n_rows % nt  # static at trace time
    if rem == 0:
        out_ref[0] = jnp.sum(h, axis=1)
    else:
        last = pl.num_programs(0) - 1

        @pl.when(i != last)
        def _():
            out_ref[0] = jnp.sum(h, axis=1)

        @pl.when(i == last)  # only the ragged last tile pays for the mask
        def _():
            row = jax.lax.broadcasted_iota(jnp.int32, (nt, 1), 0)
            hm = jnp.where((row < rem)[None, :, :], h, 0.0)
            out_ref[0] = jnp.sum(hm, axis=1)


# ---------------------------------------------------------------------------
# Tiled Pass B: z_tile = sum_m beta[m] * x[m, tile]   (parallel grid).
# ---------------------------------------------------------------------------
def _weighted_sum_kernel(x_ref, beta_ref, out_ref):
    M = x_ref.shape[0]
    bv = beta_ref[...]                                       # (M, 1) f32
    acc = x_ref[0].astype(jnp.float32) * bv[0:1, :]
    for m in range(1, M):
        acc = acc + x_ref[m].astype(jnp.float32) * bv[m:m + 1, :]
    out_ref[...] = acc.astype(out_ref.dtype)


# ---------------------------------------------------------------------------
# Wrapper
# ---------------------------------------------------------------------------
def attention_forward(x, w, b, att, *, matmul_in_bf16=True,
                      force_path=None, row_tile=None):
    """Semantic attention forward.

    x:   (M, N, H) stacked metapath embeddings.
    w:   (H, H) fc weight, pre-transposed so that y = x @ w  (== x @ W.T).
    b:   (1, H) fc bias.     att: (1, H) attention vector.
    Returns z of shape (N, H) in x.dtype.
    """
    M, N, H = x.shape
    assert w.shape == (H, H) and b.shape == (1, H) and att.shape == (1, H)

    isz = x.dtype.itemsize
    osz = isz
    Hp = _round_up(H, 128)          # lane-padded width as laid out in VMEM
    Np8 = _round_up(N, 8)
    phys = _vmem_capacity_bytes()
    vmem_limit = int(phys * 0.75)   # 96 MiB on v5e/v6e, 48 MiB on v7x
    work_budget = int(phys * 0.45)  # what our buffers may occupy

    # ---------------- fused single-kernel fast path ----------------
    fused_need = (M * Np8 * Hp * isz          # x resident
                  + 2 * Np8 * Hp * 4          # f32 h + weighted-sum accumulator
                  + Np8 * Hp * (osz + 4)      # out (+ cast temp)
                  + Hp * Hp * isz             # resident W
                  + (1 << 20))                # slack (b, att, compiler scratch)
    use_fused = (force_path == "fused"
                 or (force_path is None and fused_need <= work_budget))
    if use_fused:
        return pl.pallas_call(
            functools.partial(_fused_kernel, mm_bf16=matmul_in_bf16),
            out_shape=jax.ShapeDtypeStruct((N, H), x.dtype),
            compiler_params=pltpu.CompilerParams(
                vmem_limit_bytes=vmem_limit),
        )(x, w, b, att)

    # ---------------- tiled two-pass fallback ----------------
    # Pass A: per-row-of-tile budget = 2x double-buffered x rows (native dtype)
    # + f32 h / mask temp / bf16 cast slack, all at lane-padded width.
    resident_a = Hp * Hp * isz + 8 * Hp * 4 + (2 << 20)
    per_row_a = M * Hp * (2 * isz + 12)
    nt = max(8, ((work_budget - resident_a) // per_row_a) // 8 * 8)
    if row_tile is not None:
        nt = max(8, _round_up(int(row_tile), 8))
    nt = min(nt, _round_up(N, 8))
    num_tiles = pl.cdiv(N, nt)

    part_sums = pl.pallas_call(
        functools.partial(_partial_rowsum_kernel, n_rows=N,
                          mm_bf16=matmul_in_bf16),
        out_shape=jax.ShapeDtypeStruct((num_tiles, M, H), jnp.float32),
        grid_spec=pltpu.PrefetchScalarGridSpec(
            num_scalar_prefetch=0,
            grid=(num_tiles,),
            in_specs=[
                pl.BlockSpec((M, nt, H), lambda i: (0, i, 0)),   # x tiles
                pl.BlockSpec((H, H), lambda i: (0, 0)),          # W resident
                pl.BlockSpec((1, H), lambda i: (0, 0)),          # b resident
            ],
            out_specs=pl.BlockSpec((1, M, H), lambda i: (i, 0, 0)),
        ),
        compiler_params=pltpu.CompilerParams(
            dimension_semantics=("parallel",),   # both TCs on v7x
            vmem_limit_bytes=vmem_limit),
    )(x, w, b)

    # Tiny epilogue in plain JAX: mean over the true N, project on att,
    # softmax over the M views (M scalars; negligible cost).
    sp = part_sums.sum(axis=0) * (1.0 / N)                       # (M, H) f32
    scores = jnp.sum(sp * att.astype(jnp.float32), axis=-1)      # (M,)
    beta = jax.nn.softmax(scores).astype(jnp.float32)[:, None]   # (M, 1)

    # Pass B: weighted sum of the embeds (mem-bound; use the largest tile).
    per_row_b = M * Hp * 2 * isz + Hp * (2 * osz + 8)
    nt_b = max(8, (work_budget // per_row_b) // 8 * 8)
    if row_tile is not None:
        nt_b = max(8, _round_up(int(row_tile), 8))
    nt_b = min(nt_b, _round_up(N, 8))
    num_tiles_b = pl.cdiv(N, nt_b)

    z = pl.pallas_call(
        _weighted_sum_kernel,
        out_shape=jax.ShapeDtypeStruct((N, H), x.dtype),
        grid_spec=pltpu.PrefetchScalarGridSpec(
            num_scalar_prefetch=0,
            grid=(num_tiles_b,),
            in_specs=[
                pl.BlockSpec((M, nt_b, H), lambda i: (0, i, 0)),  # x tiles
                pl.BlockSpec((M, 1), lambda i: (0, 0)),           # beta resident
            ],
            out_specs=pl.BlockSpec((nt_b, H), lambda i: (i, 0)),
        ),
        compiler_params=pltpu.CompilerParams(
            dimension_semantics=("parallel",),
            vmem_limit_bytes=vmem_limit),
    )(x, beta)
    return z


def _reference(x, w, b, att, *, matmul_in_bf16=True):
    """Pure-JAX reference mirroring the PyTorch forward (same MXU rounding)."""
    xl, wl = x, w
    if matmul_in_bf16:
        xl, wl = x.astype(jnp.bfloat16), w.astype(jnp.bfloat16)
    h = jnp.tanh(jnp.einsum("mnh,hk->mnk", xl, wl,
                            preferred_element_type=jnp.float32) + b)
    sp = h.mean(axis=1)                                          # (M, H)
    scores = (sp * att).sum(axis=-1)                             # (M,)
    beta = jax.nn.softmax(scores)
    return (x * beta[:, None, None]).sum(axis=0).astype(x.dtype)


if __name__ == "__main__":
    def make_inputs(key, M, N, H):
        k_x, k_w, k_b, k_a = jax.random.split(key, 4)
        x = jax.random.normal(k_x, (M, N, H), dtype=jnp.float32)
        # fc.weight: xavier_normal_(gain=1.414), shape (out, in); pass W.T.
        std_w = 1.414 * np.sqrt(2.0 / (H + H))
        w = (jax.random.normal(k_w, (H, H), dtype=jnp.float32) * std_w).T
        # fc.bias: PyTorch default U(-1/sqrt(fan_in), 1/sqrt(fan_in)).
        bound = 1.0 / np.sqrt(H)
        b = jax.random.uniform(k_b, (1, H), dtype=jnp.float32,
                               minval=-bound, maxval=bound)
        # att: xavier_normal_(gain=1.414), shape (1, H).
        std_a = 1.414 * np.sqrt(2.0 / (1 + H))
        att = jax.random.normal(k_a, (1, H), dtype=jnp.float32) * std_a
        return x, w, b, att

    keys = jax.random.split(jax.random.PRNGKey(0), 3)

    # Case 1: M=3 views, N=8 nodes, H=32 -> fused single-kernel path.
    x, w, b, att = make_inputs(keys[0], 3, 8, 32)
    out = jax.block_until_ready(attention_forward(x, w, b, att))
    ref = jax.block_until_ready(_reference(x, w, b, att))
    np.testing.assert_allclose(np.asarray(out), np.asarray(ref),
                               rtol=1e-4, atol=1e-5)

    # Case 2: fused path with N not a multiple of 8.
    x, w, b, att = make_inputs(keys[1], 4, 20, 32)
    out = jax.block_until_ready(attention_forward(x, w, b, att))
    ref = jax.block_until_ready(_reference(x, w, b, att))
    np.testing.assert_allclose(np.asarray(out), np.asarray(ref),
                               rtol=1e-4, atol=1e-5)

    # Case 3: forced tiled two-pass path with a ragged last tile
    # (N=36, row tile 16 -> tiles of 16/16/4): exercises the pl.when-gated
    # padded-row mask, the parallel partial-sum pass and OOB-write discard.
    x, w, b, att = make_inputs(keys[2], 3, 36, 32)
    out = jax.block_until_ready(
        attention_forward(x, w, b, att, force_path="tiled", row_tile=16))
    ref = jax.block_until_ready(_reference(x, w, b, att))
    np.testing.assert_allclose(np.asarray(out), np.asarray(ref),
                               rtol=1e-4, atol=1e-5)

    print("KERNEL_OK")
</pallas_src>

<mosaic_0001>
module attributes {stable_mosaic.version = 11 : i64} {
  func.func @_fused_kernel(%arg0: memref<3x8x32xf32, #tpu.memory_space<vmem>>, %arg1: memref<32x32xf32, #tpu.memory_space<vmem>>, %arg2: memref<1x32xf32, #tpu.memory_space<vmem>>, %arg3: memref<1x32xf32, #tpu.memory_space<vmem>>, %arg4: memref<8x32xf32, #tpu.memory_space<vmem>>) attributes {dimension_semantics = [], scalar_prefetch = 0 : i64, scratch_operands = 0 : i64, tpu.core_type = #tpu.core_type<tc>} {
    %c0 = arith.constant 0 : index
    %c0_0 = arith.constant 0 : index
    %0 = vector.load %arg1[%c0, %c0_0] : memref<32x32xf32, #tpu.memory_space<vmem>>, vector<32x32xf32>
    %1 = arith.truncf %0 : vector<32x32xf32> to vector<32x32xbf16>
    %c0_1 = arith.constant 0 : index
    %c0_2 = arith.constant 0 : index
    %2 = vector.load %arg2[%c0_1, %c0_2] : memref<1x32xf32, #tpu.memory_space<vmem>>, vector<1x32xf32>
    %c0_3 = arith.constant 0 : index
    %c0_4 = arith.constant 0 : index
    %3 = vector.load %arg3[%c0_3, %c0_4] : memref<1x32xf32, #tpu.memory_space<vmem>>, vector<1x32xf32>
    %c0_5 = arith.constant 0 : index
    %c0_6 = arith.constant 0 : index
    %c0_7 = arith.constant 0 : index
    %4 = vector.load %arg0[%c0_5, %c0_6, %c0_7] : memref<3x8x32xf32, #tpu.memory_space<vmem>>, vector<1x8x32xf32>
    %5 = vector.shape_cast %4 : vector<1x8x32xf32> to vector<8x32xf32>
    %6 = arith.truncf %5 : vector<8x32xf32> to vector<8x32xbf16>
    %cst = arith.constant dense<0.000000e+00> : vector<8x32xf32>
    %7 = tpu.matmul %6, %1, %cst {dimension_numbers = #tpu.dot_dimension_numbers<[1], [0], [0], [1], [0, 0, 1, 1], [], []>} : vector<8x32xbf16>, vector<32x32xbf16>, vector<8x32xf32> -> vector<8x32xf32>
    %8 = vector.broadcast %2 : vector<1x32xf32> to vector<8x32xf32>
    %9 = arith.addf %7, %8 : vector<8x32xf32>
    %10 = math.tanh %9 : vector<8x32xf32>
    %cst_8 = arith.constant dense<0.000000e+00> : vector<32xf32>
    %11 = vector.multi_reduction <add>, %10, %cst_8 [0] : vector<8x32xf32> to vector<32xf32>
    %12 = vector.shape_cast %11 : vector<32xf32> to vector<1x32xf32>
    %cst_9 = arith.constant 1.250000e-01 : f32
    %13 = vector.broadcast %cst_9 : f32 to vector<1x32xf32>
    %14 = arith.mulf %12, %13 : vector<1x32xf32>
    %15 = arith.mulf %14, %3 : vector<1x32xf32>
    %cst_10 = arith.constant dense<0.000000e+00> : vector<1xf32>
    %16 = vector.multi_reduction <add>, %15, %cst_10 [1] : vector<1x32xf32> to vector<1xf32>
    %17 = vector.shape_cast %16 : vector<1xf32> to vector<1x1xf32>
    %c1 = arith.constant 1 : index
    %c0_11 = arith.constant 0 : index
    %c0_12 = arith.constant 0 : index
    %18 = vector.load %arg0[%c1, %c0_11, %c0_12] : memref<3x8x32xf32, #tpu.memory_space<vmem>>, vector<1x8x32xf32>
    %19 = vector.shape_cast %18 : vector<1x8x32xf32> to vector<8x32xf32>
    %20 = arith.truncf %19 : vector<8x32xf32> to vector<8x32xbf16>
    %cst_13 = arith.constant dense<0.000000e+00> : vector<8x32xf32>
    %21 = tpu.matmul %20, %1, %cst_13 {dimension_numbers = #tpu.dot_dimension_numbers<[1], [0], [0], [1], [0, 0, 1, 1], [], []>} : vector<8x32xbf16>, vector<32x32xbf16>, vector<8x32xf32> -> vector<8x32xf32>
    %22 = vector.broadcast %2 : vector<1x32xf32> to vector<8x32xf32>
    %23 = arith.addf %21, %22 : vector<8x32xf32>
    %24 = math.tanh %23 : vector<8x32xf32>
    %cst_14 = arith.constant dense<0.000000e+00> : vector<32xf32>
    %25 = vector.multi_reduction <add>, %24, %cst_14 [0] : vector<8x32xf32> to vector<32xf32>
    %26 = vector.shape_cast %25 : vector<32xf32> to vector<1x32xf32>
    %cst_15 = arith.constant 1.250000e-01 : f32
    %27 = vector.broadcast %cst_15 : f32 to vector<1x32xf32>
    %28 = arith.mulf %26, %27 : vector<1x32xf32>
    %29 = arith.mulf %28, %3 : vector<1x32xf32>
    %cst_16 = arith.constant dense<0.000000e+00> : vector<1xf32>
    %30 = vector.multi_reduction <add>, %29, %cst_16 [1] : vector<1x32xf32> to vector<1xf32>
    %31 = vector.shape_cast %30 : vector<1xf32> to vector<1x1xf32>
    %c2 = arith.constant 2 : index
    %c0_17 = arith.constant 0 : index
    %c0_18 = arith.constant 0 : index
    %32 = vector.load %arg0[%c2, %c0_17, %c0_18] : memref<3x8x32xf32, #tpu.memory_space<vmem>>, vector<1x8x32xf32>
    %33 = vector.shape_cast %32 : vector<1x8x32xf32> to vector<8x32xf32>
    %34 = arith.truncf %33 : vector<8x32xf32> to vector<8x32xbf16>
    %cst_19 = arith.constant dense<0.000000e+00> : vector<8x32xf32>
    %35 = tpu.matmul %34, %1, %cst_19 {dimension_numbers = #tpu.dot_dimension_numbers<[1], [0], [0], [1], [0, 0, 1, 1], [], []>} : vector<8x32xbf16>, vector<32x32xbf16>, vector<8x32xf32> -> vector<8x32xf32>
    %36 = vector.broadcast %2 : vector<1x32xf32> to vector<8x32xf32>
    %37 = arith.addf %35, %36 : vector<8x32xf32>
    %38 = math.tanh %37 : vector<8x32xf32>
    %cst_20 = arith.constant dense<0.000000e+00> : vector<32xf32>
    %39 = vector.multi_reduction <add>, %38, %cst_20 [0] : vector<8x32xf32> to vector<32xf32>
    %40 = vector.shape_cast %39 : vector<32xf32> to vector<1x32xf32>
    %cst_21 = arith.constant 1.250000e-01 : f32
    %41 = vector.broadcast %cst_21 : f32 to vector<1x32xf32>
    %42 = arith.mulf %40, %41 : vector<1x32xf32>
    %43 = arith.mulf %42, %3 : vector<1x32xf32>
    %cst_22 = arith.constant dense<0.000000e+00> : vector<1xf32>
    %44 = vector.multi_reduction <add>, %43, %cst_22 [1] : vector<1x32xf32> to vector<1xf32>
    %45 = vector.shape_cast %44 : vector<1xf32> to vector<1x1xf32>
    %46 = arith.maximumf %17, %31 : vector<1x1xf32>
    %47 = arith.maximumf %46, %45 : vector<1x1xf32>
    %48 = arith.subf %17, %47 : vector<1x1xf32>
    %49 = math.exp %48 : vector<1x1xf32>
    %50 = arith.subf %31, %47 : vector<1x1xf32>
    %51 = math.exp %50 : vector<1x1xf32>
    %52 = arith.subf %45, %47 : vector<1x1xf32>
    %53 = math.exp %52 : vector<1x1xf32>
    %54 = arith.addf %49, %51 : vector<1x1xf32>
    %55 = arith.addf %54, %53 : vector<1x1xf32>
    %56 = tpu.reciprocal %55 {approx = true} : vector<1x1xf32> -> vector<1x1xf32>
    %57 = arith.mulf %55, %56 : vector<1x1xf32>
    %cst_23 = arith.constant 2.000000e+00 : f32
    %58 = vector.broadcast %cst_23 : f32 to vector<1x1xf32>
    %59 = arith.subf %58, %57 : vector<1x1xf32>
    %60 = arith.mulf %56, %59 : vector<1x1xf32>
    %c0_24 = arith.constant 0 : index
    %c0_25 = arith.constant 0 : index
    %c0_26 = arith.constant 0 : index
    %61 = vector.load %arg0[%c0_24, %c0_25, %c0_26] : memref<3x8x32xf32, #tpu.memory_space<vmem>>, vector<1x8x32xf32>
    %62 = vector.shape_cast %61 : vector<1x8x32xf32> to vector<8x32xf32>
    %63 = arith.mulf %49, %60 : vector<1x1xf32>
    %64 = vector.broadcast %63 : vector<1x1xf32> to vector<8x32xf32>
    %65 = arith.mulf %62, %64 : vector<8x32xf32>
    %c1_27 = arith.constant 1 : index
    %c0_28 = arith.constant 0 : index
    %c0_29 = arith.constant 0 : index
    %66 = vector.load %arg0[%c1_27, %c0_28, %c0_29] : memref<3x8x32xf32, #tpu.memory_space<vmem>>, vector<1x8x32xf32>
    %67 = vector.shape_cast %66 : vector<1x8x32xf32> to vector<8x32xf32>
    %68 = arith.mulf %51, %60 : vector<1x1xf32>
    %69 = vector.broadcast %68 : vector<1x1xf32> to vector<8x32xf32>
    %70 = arith.mulf %67, %69 : vector<8x32xf32>
    %71 = arith.addf %65, %70 : vector<8x32xf32>
    %c2_30 = arith.constant 2 : index
    %c0_31 = arith.constant 0 : index
    %c0_32 = arith.constant 0 : index
    %72 = vector.load %arg0[%c2_30, %c0_31, %c0_32] : memref<3x8x32xf32, #tpu.memory_space<vmem>>, vector<1x8x32xf32>
    %73 = vector.shape_cast %72 : vector<1x8x32xf32> to vector<8x32xf32>
    %74 = arith.mulf %53, %60 : vector<1x1xf32>
    %75 = vector.broadcast %74 : vector<1x1xf32> to vector<8x32xf32>
    %76 = arith.mulf %73, %75 : vector<8x32xf32>
    %77 = arith.addf %71, %76 : vector<8x32xf32>
    %c0_33 = arith.constant 0 : index
    %c0_34 = arith.constant 0 : index
    %78 = vector.load %arg4[%c0_33, %c0_34] : memref<8x32xf32, #tpu.memory_space<vmem>>, vector<8x32xf32>
    tpu.vector_store %arg4[%c0_33, %c0_34], %77 {strides = array<i32>} : memref<8x32xf32, #tpu.memory_space<vmem>>, vector<8x32xf32>,
    return
  }
}

</mosaic_0001>

<llo_original>
// kernel: tpu_custom_call.1
$region0: #{tpu_custom_call.1}
  #allocation0 [shape = 'u32[]', space=smem, size = 0x4, offset = 0x4, fixed_abs, tag = 'smem constant byte address 0x4 - core index']
  #allocation1 [shape = 'u32[144,128]{1,0:T(1,128)}', space=vmem, size = 0x12000, scoped, tag = 'internal scratch']
  %s0 = inlined_call_operand.hbm [shape: f32[3,8,32], index: 0, kind: input, shape index: {}]
  %s1 = inlined_call_operand.hbm [shape: f32[32,32], index: 1, kind: input, shape index: {}]
  %s2 = inlined_call_operand.vmem [shape: f32[1,32], index: 2, kind: input, shape index: {}]
  %s3 = inlined_call_operand.vmem [shape: f32[1,32], index: 3, kind: input, shape index: {}]
  %s4 = inlined_call_operand.hbm [shape: f32[8,32], index: 4, kind: output, shape index: {}]
  %s5 = sld [smem:[#allocation0]]
  $region34: #{tpu_custom_call.1} parent=0
    _
  %s7 = ssub.s32 1, %s5
  %s8 = scalar_select 0, %s7, %s5
  $region1: #{tpu_custom_call.1} parent=0
    #allocation2 [shape = 'u8[12288]{0}', space=vmem, size = 0x3000, scoped, tag = 'input window, operand 0, single buffered']
    #allocation3 [shape = 's32[1]{0}', space=sflag, size = 0x4, scoped, tag = 'scoped memory for tpu_custom_call.1']
    #allocation4 [shape = 's32[1]{0}', space=sflag, size = 0x4, scoped, tag = 'scoped memory for tpu_custom_call.1']
    #allocation5 [shape = 'u8[16384]{0}', space=vmem, size = 0x4000, scoped, tag = 'input window, operand 1, single buffered']
    #allocation6 [shape = 's32[1]{0}', space=sflag, size = 0x4, scoped, tag = 'scoped memory for tpu_custom_call.1']
    #allocation7 [shape = 'u8[4096]{0}', space=vmem, size = 0x1000, scoped, tag = 'output window, operand 0, single buffered']
    %9 = vsyncpa [#allocation3], 0
    %10 = vsyncpa [#allocation6], 0
    %11 = vsyncpa [#allocation4], 0
    // Predicated region
    $region2: #{tpu_custom_call.1} parent=1 // pred_check
      _
    $region3: #{tpu_custom_call.1} parent=1 // pred_check_branch
      %13 = sbr.rel (0) target = $region5
    $region4: #{tpu_custom_call.1} parent=1 // pred_region
      %s15 = ssub.s32 384, 384
      %16 = vsyncadd [#allocation3], %s15
      %s17 = sshll.u32 [#allocation2], 4
      %s18 = int_to_ptr.vmem [resolvable:$true] %s17
      %23 = dma.hbm_to_vmem [thread:$0]  %s0, 384, %s18, [#allocation3], 128, 128, 8
    $region5: #{tpu_custom_call.1} parent=1 // pred_fallthru
      _
    // Predicated region
    $region6: #{tpu_custom_call.1} parent=1 // pred_check
      _
    $region7: #{tpu_custom_call.1} parent=1 // pred_check_branch
      %25 = sbr.rel (0) target = $region9
    $region8: #{tpu_custom_call.1} parent=1 // pred_region
      %s27 = ssub.s32 512, 512
      %28 = vsyncadd [#allocation6], %s27
      %s29 = sshll.u32 [#allocation5], 4
      %s30 = int_to_ptr.vmem [resolvable:$true] %s29
      %35 = dma.hbm_to_vmem [thread:$0]  %s1, 512, %s30, [#allocation6], 128, 128, 8
    $region9: #{tpu_custom_call.1} parent=1 // pred_fallthru
      _
    // Predicated region
    $region10: #{tpu_custom_call.1} parent=1 // pred_check
      _
    $region11: #{tpu_custom_call.1} parent=1 // pred_check_branch
      %37 = sbr.rel (0) target = $region13
    $region12: #{tpu_custom_call.1} parent=1 // pred_region
      _
    $region13: #{tpu_custom_call.1} parent=1 // pred_fallthru
      _
    // Predicated region
    $region14: #{tpu_custom_call.1} parent=1 // pred_check
      _
    $region15: #{tpu_custom_call.1} parent=1 // pred_check_branch
      %39 = sbr.rel (0) target = $region17
    $region16: #{tpu_custom_call.1} parent=1 // pred_region
      _
    $region17: #{tpu_custom_call.1} parent=1 // pred_fallthru
      _
    // Predicated region
    $region18: #{tpu_custom_call.1} parent=1 // pred_check
      _
    $region19: #{tpu_custom_call.1} parent=1 // pred_check_branch
      %41 = sbr.rel (0) target = $region21
    $region20: #{tpu_custom_call.1} parent=1 // pred_region
      %42 = dma.done [#allocation3], 384
    $region21: #{tpu_custom_call.1} parent=1 // pred_fallthru
      _
    // Predicated region
    $region22: #{tpu_custom_call.1} parent=1 // pred_check
      _
    $region23: #{tpu_custom_call.1} parent=1 // pred_check_branch
      %44 = sbr.rel (0) target = $region25
    $region24: #{tpu_custom_call.1} parent=1 // pred_region
      %45 = dma.done [#allocation6], 512
    $region25: #{tpu_custom_call.1} parent=1 // pred_fallthru
      _
    %v47 = vld [vmem:[#allocation5] sm:$0xff]
    %v48 = vld [vmem:[#allocation5 + $0x8] sm:$0xff]
    %v49 = vld [vmem:[#allocation5 + $0x10] sm:$0xff]
    %v50 = vld [vmem:[#allocation5 + $0x18] sm:$0xff]
    %v51 = vpack.c.bf16 %v48, %v47
    %v52 = vpack.c.bf16 %v50, %v49
    %v53 = vld [vmem:[%s2] sm:$0x1]
    %v54 = vld [vmem:[%s3] sm:$0x1]
    %v55 = vld [vmem:[#allocation2] sm:$0xff]
    %v56 = vpack.c.bf16 %v55, %v55
    %v58 = vlaneseq
    %v59 = vshrl.u32 %v58, 7
    %v60 = vsub.s32 0, %v59
    %v61 = vrot.slane %v53, %v60
    %vm63 = vcmask 261120
    %v65 = vsel %vm63, %v56, 0
    %67 = vmatprep.subr.bf16.mxu0 0
    %68 = vmatpush1.bf16.msra.mxu0 0
    %69 = vmatprep.subr.bf16.mxu0 0
    %70 = vmatpush1.bf16.msra.mxu0 0
    %71 = vmatprep.subr.bf16.mxu0 0
    %72 = vmatpush1.bf16.msra.mxu0 0
    %73 = vmatprep.subr.bf16.mxu0 0
    %74 = vmatpush1.bf16.msra.mxu0 0
    %75 = vmatprep.subr.bf16.mxu0 0
    %76 = vmatpush1.bf16.msra.mxu0 0
    %77 = vmatprep.subr.bf16.mxu0 0
    %78 = vmatpush1.bf16.msra.mxu0 0
    %79 = vmatprep.subr.bf16.mxu0 0
    %80 = vmatpush1.bf16.msra.mxu0 %v52
    %81 = vmatprep.subr.bf16.mxu0 0
    %82 = vmatpush1.bf16.msra.mxu0 %v51
    %83 = vmatprep.subr.bf16.mxu0 0
    %84 = vmatpush2.bf16.msra.mxu0 0
    %85 = vmatprep.subr.bf16.mxu0 0
    %86 = vmatpush2.bf16.msra.mxu0 0
    %87 = vmatprep.subr.bf16.mxu0 0
    %88 = vmatpush2.bf16.msra.mxu0 0
    %89 = vmatprep.subr.bf16.mxu0 0
    %90 = vmatpush2.bf16.msra.mxu0 0
    %91 = vmatprep.subr.bf16.mxu0 0
    %92 = vmatpush2.bf16.msra.mxu0 0
    %93 = vmatprep.subr.bf16.mxu0 0
    %94 = vmatpush2.bf16.msra.mxu0 0
    %95 = vmatprep.subr.bf16.mxu0 0
    %96 = vmatpush2.bf16.msra.mxu0 0
    %97 = vmatprep.subr.bf16.mxu0 0
    %98 = vmatpush2.bf16.msra.mxu0 0
    %99 = vmatprep.mubr.bf16.mxu0 0
    %100 = vmatmul.mubr.bf16.gmra.mxu0 %v65
    %v101 = vpop.f32.mrf.mxu0
    %v102 = vadd.f32 %v61, %v101
    %v103 = vpop.f32.mrf.mxu0
    %v104 = vpop.f32.mrf.mxu0
    %v105 = vpop.f32.mrf.mxu0
    %106 = vdwg.mxu0
    %v107 = vtanh.pop %v102
    %v108 = vsel %vm63, %v107, 0.0
    %v109 = vrot.slane %v108, 4
    %v110 = vadd.f32 %v108, %v109
    %v111 = vrot.slane %v110, 2
    %v112 = vadd.f32 %v110, %v111
    %v113 = vrot.slane %v112, 1
    %v114 = vadd.f32 %v112, %v113
    %v115 = vmul.f32 %v114, 0.125
    %v116 = vmul.f32 %v115, %v54
    %vm117 = vcmask 253952
    %v118 = vsel %vm117, %v116, 0.0
    %119 = vadd.xlane.f32.xlu0 %v118
    %v120 = vpop.xlane.xlu0 %119
    %s121 = scalar_lea.vmem [#allocation2], 8
    %v122 = vld [vmem:[%s121] sm:$0xff]
    %v123 = vpack.c.bf16 %v122, %v122
    %v125 = vsel %vm63, %v123, 0
    %127 = vmatprep.subr.bf16.mxu0 0
    %128 = vmatpush1.bf16.msra.mxu0 0
    %129 = vmatprep.subr.bf16.mxu0 0
    %130 = vmatpush1.bf16.msra.mxu0 0
    %131 = vmatprep.subr.bf16.mxu0 0
    %132 = vmatpush1.bf16.msra.mxu0 0
    %133 = vmatprep.subr.bf16.mxu0 0
    %134 = vmatpush1.bf16.msra.mxu0 0
    %135 = vmatprep.subr.bf16.mxu0 0
    %136 = vmatpush1.bf16.msra.mxu0 0
    %137 = vmatprep.subr.bf16.mxu0 0
    %138 = vmatpush1.bf16.msra.mxu0 0
    %139 = vmatprep.subr.bf16.mxu0 0
    %140 = vmatpush1.bf16.msra.mxu0 %v52
    %141 = vmatprep.subr.bf16.mxu0 0
    %142 = vmatpush1.bf16.msra.mxu0 %v51
    %143 = vmatprep.subr.bf16.mxu0 0
    %144 = vmatpush2.bf16.msra.mxu0 0
    %145 = vmatprep.subr.bf16.mxu0 0
    %146 = vmatpush2.bf16.msra.mxu0 0
    %147 = vmatprep.subr.bf16.mxu0 0
    %148 = vmatpush2.bf16.msra.mxu0 0
    %149 = vmatprep.subr.bf16.mxu0 0
    %150 = vmatpush2.bf16.msra.mxu0 0
    %151 = vmatprep.subr.bf16.mxu0 0
    %152 = vmatpush2.bf16.msra.mxu0 0
    %153 = vmatprep.subr.bf16.mxu0 0
    %154 = vmatpush2.bf16.msra.mxu0 0
    %155 = vmatprep.subr.bf16.mxu0 0
    %156 = vmatpush2.bf16.msra.mxu0 0
    %157 = vmatprep.subr.bf16.mxu0 0
    %158 = vmatpush2.bf16.msra.mxu0 0
    %159 = vmatprep.mubr.bf16.mxu0 0
    %160 = vmatmul.mubr.bf16.gmra.mxu0 %v125
    %v161 = vpop.f32.mrf.mxu0
    %v162 = vadd.f32 %v61, %v161
    %v163 = vpop.f32.mrf.mxu0
    %v164 = vpop.f32.mrf.mxu0
    %v165 = vpop.f32.mrf.mxu0
    %166 = vdwg.mxu0
    %v167 = vtanh.pop %v162
    %v168 = vsel %vm63, %v167, 0.0
    %v169 = vrot.slane %v168, 4
    %v170 = vadd.f32 %v168, %v169
    %v171 = vrot.slane %v170, 2
    %v172 = vadd.f32 %v170, %v171
    %v173 = vrot.slane %v172, 1
    %v174 = vadd.f32 %v172, %v173
    %v175 = vmul.f32 %v174, 0.125
    %v176 = vmul.f32 %v175, %v54
    %v177 = vsel %vm117, %v176, 0.0
    %178 = vadd.xlane.f32.xlu0 %v177
    %v179 = vpop.xlane.xlu0 %178
    %s180 = scalar_lea.vmem [#allocation2], 16
    %v181 = vld [vmem:[%s180] sm:$0xff]
    %v182 = vpack.c.bf16 %v181, %v181
    %v184 = vsel %vm63, %v182, 0
    %186 = vmatprep.subr.bf16.mxu0 0
    %187 = vmatpush1.bf16.msra.mxu0 0
    %188 = vmatprep.subr.bf16.mxu0 0
    %189 = vmatpush1.bf16.msra.mxu0 0
    %190 = vmatprep.subr.bf16.mxu0 0
    %191 = vmatpush1.bf16.msra.mxu0 0
    %192 = vmatprep.subr.bf16.mxu0 0
    %193 = vmatpush1.bf16.msra.mxu0 0
    %194 = vmatprep.subr.bf16.mxu0 0
    %195 = vmatpush1.bf16.msra.mxu0 0
    %196 = vmatprep.subr.bf16.mxu0 0
    %197 = vmatpush1.bf16.msra.mxu0 0
    %198 = vmatprep.subr.bf16.mxu0 0
    %199 = vmatpush1.bf16.msra.mxu0 %v52
    %200 = vmatprep.subr.bf16.mxu0 0
    %201 = vmatpush1.bf16.msra.mxu0 %v51
    %202 = vmatprep.subr.bf16.mxu0 0
    %203 = vmatpush2.bf16.msra.mxu0 0
    %204 = vmatprep.subr.bf16.mxu0 0
    %205 = vmatpush2.bf16.msra.mxu0 0
    %206 = vmatprep.subr.bf16.mxu0 0
    %207 = vmatpush2.bf16.msra.mxu0 0
    %208 = vmatprep.subr.bf16.mxu0 0
    %209 = vmatpush2.bf16.msra.mxu0 0
    %210 = vmatprep.subr.bf16.mxu0 0
    %211 = vmatpush2.bf16.msra.mxu0 0
    %212 = vmatprep.subr.bf16.mxu0 0
    %213 = vmatpush2.bf16.msra.mxu0 0
    %214 = vmatprep.subr.bf16.mxu0 0
    %215 = vmatpush2.bf16.msra.mxu0 0
    %216 = vmatprep.subr.bf16.mxu0 0
    %217 = vmatpush2.bf16.msra.mxu0 0
    %218 = vmatprep.mubr.bf16.mxu0 0
    %219 = vmatmul.mubr.bf16.gmra.mxu0 %v184
    %v220 = vpop.f32.mrf.mxu0
    %v221 = vadd.f32 %v61, %v220
    %v222 = vpop.f32.mrf.mxu0
    %v223 = vpop.f32.mrf.mxu0
    %v224 = vpop.f32.mrf.mxu0
    %225 = vdwg.mxu0
    %v226 = vtanh.pop %v221
    %v227 = vsel %vm63, %v226, 0.0
    %v228 = vrot.slane %v227, 4
    %v229 = vadd.f32 %v227, %v228
    %v230 = vrot.slane %v229, 2
    %v231 = vadd.f32 %v229, %v230
    %v232 = vrot.slane %v231, 1
    %v233 = vadd.f32 %v231, %v232
    %v234 = vmul.f32 %v233, 0.125
    %v235 = vmul.f32 %v234, %v54
    %v236 = vsel %vm117, %v235, 0.0
    %237 = vadd.xlane.f32.xlu0 %v236
    %v238 = vpop.xlane.xlu0 %237
    %v239 = vmax.f32 %v120, %v179
    %v240 = vmax.f32 %v239, %v238
    %v241 = vsub.f32 %v120, %v240
    %v242 = vmul.f32 %v241, 1.442695
    %v243 = vpow.pop %v242
    %v244 = vsub.f32 %v179, %v240
    %v245 = vmul.f32 %v244, 1.442695
    %v246 = vpow.pop %v245
    %v247 = vsub.f32 %v238, %v240
    %v248 = vmul.f32 %v247, 1.442695
    %v249 = vpow.pop %v248
    %v250 = vadd.f32 %v243, %v246
    %v251 = vadd.f32 %v250, %v249
    %v252 = vrcp.pop %v251
    %v253 = vmul.f32 %v251, %v252
    %v254 = vsub.f32 2.0, %v253
    %v255 = vmul.f32 %v252, %v254
    %v256 = vmul.f32 %v243, %v255
    %v257 = vlaneseq
    %v258 = vshrl.u32 %v257, 7
    %v259 = vsub.s32 0, %v258
    %v260 = vrot.slane %v256, %v259
    %v261 = vmul.f32 %v55, %v260
    %v262 = vmul.f32 %v246, %v255
    %v263 = vlaneseq
    %v264 = vshrl.u32 %v263, 7
    %v265 = vsub.s32 0, %v264
    %v266 = vrot.slane %v262, %v265
    %v267 = vmul.f32 %v122, %v266
    %v268 = vadd.f32 %v261, %v267
    %v269 = vmul.f32 %v249, %v255
    %v270 = vlaneseq
    %v271 = vshrl.u32 %v270, 7
    %v272 = vsub.s32 0, %v271
    %v273 = vrot.slane %v269, %v272
    %v274 = vmul.f32 %v181, %v273
    %v275 = vadd.f32 %v268, %v274
    %276 = vst.msk [vmem:[#allocation7] sm:$0xff] %vm63, %v275
    // Predicated region
    $region26: #{tpu_custom_call.1} parent=1 // pred_check
      _
    $region27: #{tpu_custom_call.1} parent=1 // pred_check_branch
      %278 = sbr.rel (0) target = $region29
    $region28: #{tpu_custom_call.1} parent=1 // pred_region
      %s280 = ssub.s32 128, 128
      %281 = vsyncadd [#allocation4], %s280
      %s283 = sshll.u32 [#allocation7], 4
      %s284 = int_to_ptr.vmem [resolvable:$true] %s283
      %286 = dma.vmem_to_hbm [thread:$0]  %s284, 128, %s4, [#allocation4]
    $region29: #{tpu_custom_call.1} parent=1 // pred_fallthru
      _
    // Predicated region
    $region30: #{tpu_custom_call.1} parent=1 // pred_check
      _
    $region31: #{tpu_custom_call.1} parent=1 // pred_check_branch
      %288 = sbr.rel (0) target = $region33
    $region32: #{tpu_custom_call.1} parent=1 // pred_region
      %289 = dma.done [#allocation4], 128
    $region33: #{tpu_custom_call.1} parent=1 // pred_fallthru
      _
    %290 = vsyncpa [#allocation3], 1
    %291 = vsyncpa [#allocation6], 1
    %292 = vsyncpa [#allocation4], 1

</llo_original>
